<compile_context>
chip_gen: v5e
topology: v5e:2x2
jax: 0.10.0
libtpu: 0.0.40
codegen_flags: <defaults>
</compile_context>

<pallas_src>
import jax
import jax.numpy as jnp
from jax.experimental import pallas as pl
from jax.experimental.pallas import tpu as pltpu


def _round_down(x: int, m: int) -> int:
    return (x // m) * m


def _vmem_capacity_bytes() -> int:
    """Trace-time VMEM capacity query with a conservative fallback (v7x per-TC size)."""
    try:
        info = pltpu.get_tpu_info()
        for attr in ("vmem_capacity_bytes", "vmem_size_bytes", "vmem_bytes"):
            v = getattr(info, attr, None)
            if v:
                return int(v)
    except Exception:
        pass
    return 64 * 1024 * 1024


def _make_kernel(T_total: int, t_tile: int, chunk: int):
    """Build the kernel closed over the true T (for ragged-tail masking)."""
    needs_col_mask = (T_total % t_tile) != 0

    def kernel(r0_ref, r1_ref, m0_ref, m1_ref, mu_ref, out_ref, s0_acc, s1_acc):
        # Grid = (B tiles, T tiles); T is the reduction axis (last, "arbitrary").
        t = pl.program_id(1)

        @pl.when(t == 0)
        def _():
            s0_acc[...] = jnp.zeros_like(s0_acc)
            s1_acc[...] = jnp.zeros_like(s1_acc)

        b_tile = s0_acc.shape[0]
        acc0 = s0_acc[...]
        acc1 = s1_acc[...]

        # Chunkwise load -> cast -> multiply -> accumulate (no full-tile f32 temps).
        # Static 128-aligned slices on the refs are free views.
        for k in range(0, t_tile, chunk):
            r0 = r0_ref[:, k:k + chunk].astype(jnp.float32)
            m0 = m0_ref[:, k:k + chunk].astype(jnp.float32)
            r1 = r1_ref[:, k:k + chunk].astype(jnp.float32)
            m1 = m1_ref[:, k:k + chunk].astype(jnp.float32)
            c0 = r0 * (1.0 - m0)
            c1 = r1 * (1.0 - m1)
            if needs_col_mask:
                # Mask columns beyond the true T (ragged last T tile reads garbage).
                # Use where (not multiply) so NaN/Inf garbage cannot leak through.
                col = (t * t_tile + k
                       + jax.lax.broadcasted_iota(jnp.int32, (b_tile, chunk), 1))
                valid = col < T_total
                c0 = jnp.where(valid, c0, 0.0)
                c1 = jnp.where(valid, c1, 0.0)
            acc0 = acc0 + c0
            acc1 = acc1 + c1

        s0_acc[...] = acc0
        s1_acc[...] = acc1

        # Finalize once per B tile: XLU cross-lane reduce, EUP logs, BCE.
        @pl.when(t == pl.num_programs(1) - 1)
        def _():
            s0 = jnp.sum(s0_acc[...], axis=1, keepdims=True)   # (B_tile, 1)
            s1 = jnp.sum(s1_acc[...], axis=1, keepdims=True)
            mu = mu_ref[...].astype(jnp.float32)                # (B_tile, 1)
            p = s1 / (s1 + s0 + 1e-6)
            # PyTorch BCELoss clamps the log terms at -100.
            log_p = jnp.maximum(jnp.log(p), -100.0)
            log_1mp = jnp.maximum(jnp.log(1.0 - p), -100.0)
            out_ref[...] = -(mu * log_p + (1.0 - mu) * log_1mp)  # per-example loss

    return kernel


def linear_loss(rewards_s0, rewards_s1, mu, mask0, mask1, *, b_tile=None, t_tile=None):
    """Pallas wrapper.

    rewards_s*, mask* : (B, T) in any dtype (f32 / bf16 / int8 / bool — narrower
    dtypes directly reduce HBM traffic); mu : (B,) or (B, 1).  Returns scalar f32.
    """
    B, T = rewards_s0.shape
    assert rewards_s1.shape == (B, T) and mask0.shape == (B, T) and mask1.shape == (B, T)

    itembytes = int(rewards_s0.dtype.itemsize + rewards_s1.dtype.itemsize
                    + mask0.dtype.itemsize + mask1.dtype.itemsize)

    # --- tile selection -----------------------------------------------------------
    # B_tile <= 128 keeps the two f32 accumulators at <=32 vregs and leaves >=2
    # "parallel" B steps on v7x whenever B > 128.
    if b_tile is None:
        b_tile = B if B < 8 else min(128, _round_down(B, 8))

    cap = _vmem_capacity_bytes()
    # Streamed, double-buffered footprint budget for the 4 big inputs.
    stream_budget = min(cap // 3, 40 * 1024 * 1024)
    if t_tile is None:
        if T < 128:
            t_tile = T                                   # full dim (no T tiling)
        else:
            t_budget = max(128, _round_down(stream_budget // (2 * b_tile * itembytes), 128))
            t_tile = min(4096, t_budget, _round_down(T, 128))
    chunk = min(128, t_tile)

    grid = (pl.cdiv(B, b_tile), pl.cdiv(T, t_tile))

    mu2 = jnp.reshape(mu, (B, 1))                        # tiny; cast happens in-kernel

    # Explicit scoped-VMEM request (covers the streamed buffers + accumulators).
    footprint = 2 * b_tile * t_tile * itembytes + 2 * b_tile * 128 * 4
    vmem_limit = int(min(max(32 * 1024 * 1024, footprint + (8 << 20)), cap - (8 << 20)))

    bytes_accessed = (rewards_s0.size * rewards_s0.dtype.itemsize
                      + rewards_s1.size * rewards_s1.dtype.itemsize
                      + mask0.size * mask0.dtype.itemsize
                      + mask1.size * mask1.dtype.itemsize
                      + mu2.size * mu2.dtype.itemsize + B * 4)
    cost = pl.CostEstimate(flops=6 * B * T + 8 * B,
                           transcendentals=2 * B,
                           bytes_accessed=int(bytes_accessed))

    tile_map = lambda b, t: (b, t)
    row_map = lambda b, t: (b, 0)

    per_example = pl.pallas_call(
        _make_kernel(T, t_tile, chunk),
        out_shape=jax.ShapeDtypeStruct((B, 1), jnp.float32),
        grid_spec=pltpu.PrefetchScalarGridSpec(
            num_scalar_prefetch=0,
            grid=grid,
            in_specs=[
                pl.BlockSpec((b_tile, t_tile), tile_map),   # rewards_s0 (native dtype)
                pl.BlockSpec((b_tile, t_tile), tile_map),   # rewards_s1
                pl.BlockSpec((b_tile, t_tile), tile_map),   # mask0
                pl.BlockSpec((b_tile, t_tile), tile_map),   # mask1
                pl.BlockSpec((b_tile, 1), row_map),         # mu
            ],
            out_specs=pl.BlockSpec((b_tile, 1), row_map),
            scratch_shapes=[
                pltpu.VMEM((b_tile, chunk), jnp.float32),   # s0 partial sums
                pltpu.VMEM((b_tile, chunk), jnp.float32),   # s1 partial sums
            ],
        ),
        compiler_params=pltpu.CompilerParams(
            dimension_semantics=("parallel", "arbitrary"),
            vmem_limit_bytes=vmem_limit,
        ),
        cost_estimate=cost,
    )(rewards_s0, rewards_s1, mask0, mask1, mu2)

    # BCELoss 'mean' reduction over the true batch.  (Ragged last B tile writes only
    # its in-bounds rows; nothing to slice off.)
    return jnp.mean(per_example[:, 0])


def linear_loss_ref(rewards_s0, rewards_s1, mu, mask0, mask1):
    """Plain-JAX reference mirroring the PyTorch module."""
    r0 = rewards_s0.astype(jnp.float32)
    r1 = rewards_s1.astype(jnp.float32)
    m0 = mask0.astype(jnp.float32)
    m1 = mask1.astype(jnp.float32)
    s0 = jnp.sum(r0 * (1.0 - m0), axis=1)
    s1 = jnp.sum(r1 * (1.0 - m1), axis=1)
    p = s1 / (s1 + s0 + 1e-6)
    mu = jnp.reshape(mu, p.shape).astype(jnp.float32)
    log_p = jnp.maximum(jnp.log(p), -100.0)
    log_1mp = jnp.maximum(jnp.log(1.0 - p), -100.0)
    return jnp.mean(-(mu * log_p + (1.0 - mu) * log_1mp))


if __name__ == "__main__":
    key = jax.random.PRNGKey(0)
    k0, k1, k2, k3, k4 = jax.random.split(key, 5)

    # Rewards kept nonnegative so the linear ratio lies in [0, 1] (BCE domain),
    # matching how this loss is used in MR.py (rewards from a bounded head).

    # --- Test 1: small aligned f32 (single grid step) -------------------------------
    B, T = 8, 128
    rewards_s0 = jax.random.uniform(k0, (B, T), dtype=jnp.float32)
    rewards_s1 = jax.random.uniform(k1, (B, T), dtype=jnp.float32)
    mask0 = (jax.random.uniform(k2, (B, T)) < 0.3).astype(jnp.float32)
    mask1 = (jax.random.uniform(k3, (B, T)) < 0.3).astype(jnp.float32)
    mu = jax.random.uniform(k4, (B,), dtype=jnp.float32)

    loss = linear_loss(rewards_s0, rewards_s1, mu, mask0, mask1)
    jax.block_until_ready(loss)
    loss_ref = linear_loss_ref(rewards_s0, rewards_s1, mu, mask0, mask1)
    assert jnp.allclose(loss, loss_ref, rtol=1e-5, atol=1e-5), (loss, loss_ref)

    # --- Test 2: ragged B and T, multi-step T reduction (no wrapper padding) --------
    kk = jax.random.split(jax.random.PRNGKey(1), 5)
    B2, T2 = 10, 300
    r0 = jax.random.uniform(kk[0], (B2, T2), dtype=jnp.float32)
    r1 = jax.random.uniform(kk[1], (B2, T2), dtype=jnp.float32)
    m0 = (jax.random.uniform(kk[2], (B2, T2)) < 0.3).astype(jnp.float32)
    m1 = (jax.random.uniform(kk[3], (B2, T2)) < 0.3).astype(jnp.float32)
    mu2 = jax.random.uniform(kk[4], (B2,), dtype=jnp.float32)

    loss2 = linear_loss(r0, r1, mu2, m0, m1, b_tile=8, t_tile=128)   # grid (2, 3)
    jax.block_until_ready(loss2)
    loss2_ref = linear_loss_ref(r0, r1, mu2, m0, m1)
    assert jnp.allclose(loss2, loss2_ref, rtol=1e-5, atol=1e-5), (loss2, loss2_ref)

    # --- Test 3: narrow dtypes on the wire (bf16 rewards, int8 masks) ---------------
    kq = jax.random.split(jax.random.PRNGKey(2), 5)
    B3, T3 = 32, 256
    r0q = jax.random.uniform(kq[0], (B3, T3), dtype=jnp.float32).astype(jnp.bfloat16)
    r1q = jax.random.uniform(kq[1], (B3, T3), dtype=jnp.float32).astype(jnp.bfloat16)
    m0q = (jax.random.uniform(kq[2], (B3, T3)) < 0.3).astype(jnp.int8)
    m1q = (jax.random.uniform(kq[3], (B3, T3)) < 0.3).astype(jnp.int8)
    mu3 = jax.random.uniform(kq[4], (B3,), dtype=jnp.float32)

    loss3 = linear_loss(r0q, r1q, mu3, m0q, m1q)
    jax.block_until_ready(loss3)
    loss3_ref = linear_loss_ref(r0q, r1q, mu3, m0q, m1q)
    assert jnp.allclose(loss3, loss3_ref, rtol=1e-4, atol=1e-5), (loss3, loss3_ref)

    print("KERNEL_OK")
</pallas_src>

<mosaic_0001>
module attributes {stable_mosaic.version = 11 : i64} {
  func.func @kernel(%arg0: i32, %arg1: i32, %arg2: memref<8x128xf32, #tpu.memory_space<vmem>>, %arg3: memref<8x128xf32, #tpu.memory_space<vmem>>, %arg4: memref<8x128xf32, #tpu.memory_space<vmem>>, %arg5: memref<8x128xf32, #tpu.memory_space<vmem>>, %arg6: memref<8x1xf32, #tpu.memory_space<vmem>>, %arg7: memref<8x1xf32, #tpu.memory_space<vmem>>, %arg8: memref<8x128xf32, #tpu.memory_space<vmem>>, %arg9: memref<8x128xf32, #tpu.memory_space<vmem>>) attributes {dimension_semantics = [#tpu.dimension_semantics<parallel>, #tpu.dimension_semantics<arbitrary>], iteration_bounds = array<i64: 1, 1>, scalar_prefetch = 0 : i64, scratch_operands = 2 : i64, tpu.core_type = #tpu.core_type<tc>, window_params = [{transform_indices = @transform_0, window_bounds = array<i64: 8, 128>}, {transform_indices = @transform_1, window_bounds = array<i64: 8, 128>}, {transform_indices = @transform_2, window_bounds = array<i64: 8, 128>}, {transform_indices = @transform_3, window_bounds = array<i64: 8, 128>}, {transform_indices = @transform_4, window_bounds = array<i64: 8, 1>}, {transform_indices = @transform_5, window_bounds = array<i64: 8, 1>}]} {
    %c0_i32 = arith.constant 0 : i32
    %0 = arith.cmpi eq, %arg1, %c0_i32 : i32
    %1 = arith.extui %0 : i1 to i32
    %c0_i32_0 = arith.constant 0 : i32
    %2 = arith.cmpi ne, %1, %c0_i32_0 : i32
    scf.if %2 {
      %cst_19 = arith.constant 0.000000e+00 : f32
      %22 = vector.broadcast %cst_19 : f32 to vector<8x128xf32>
      %c0_20 = arith.constant 0 : index
      %c0_21 = arith.constant 0 : index
      %23 = vector.load %arg8[%c0_20, %c0_21] : memref<8x128xf32, #tpu.memory_space<vmem>>, vector<8x128xf32>
      tpu.vector_store %arg8[%c0_20, %c0_21], %22 {strides = array<i32>} : memref<8x128xf32, #tpu.memory_space<vmem>>, vector<8x128xf32>,
      %cst_22 = arith.constant 0.000000e+00 : f32
      %24 = vector.broadcast %cst_22 : f32 to vector<8x128xf32>
      %c0_23 = arith.constant 0 : index
      %c0_24 = arith.constant 0 : index
      %25 = vector.load %arg9[%c0_23, %c0_24] : memref<8x128xf32, #tpu.memory_space<vmem>>, vector<8x128xf32>
      tpu.vector_store %arg9[%c0_23, %c0_24], %24 {strides = array<i32>} : memref<8x128xf32, #tpu.memory_space<vmem>>, vector<8x128xf32>,
    } else {
    }
    %c0 = arith.constant 0 : index
    %c0_1 = arith.constant 0 : index
    %3 = vector.load %arg8[%c0, %c0_1] : memref<8x128xf32, #tpu.memory_space<vmem>>, vector<8x128xf32>
    %c0_2 = arith.constant 0 : index
    %c0_3 = arith.constant 0 : index
    %4 = vector.load %arg9[%c0_2, %c0_3] : memref<8x128xf32, #tpu.memory_space<vmem>>, vector<8x128xf32>
    %c0_4 = arith.constant 0 : index
    %c0_5 = arith.constant 0 : index
    %5 = vector.load %arg2[%c0_4, %c0_5] : memref<8x128xf32, #tpu.memory_space<vmem>>, vector<8x128xf32>
    %c0_6 = arith.constant 0 : index
    %c0_7 = arith.constant 0 : index
    %6 = vector.load %arg4[%c0_6, %c0_7] : memref<8x128xf32, #tpu.memory_space<vmem>>, vector<8x128xf32>
    %c0_8 = arith.constant 0 : index
    %c0_9 = arith.constant 0 : index
    %7 = vector.load %arg3[%c0_8, %c0_9] : memref<8x128xf32, #tpu.memory_space<vmem>>, vector<8x128xf32>
    %c0_10 = arith.constant 0 : index
    %c0_11 = arith.constant 0 : index
    %8 = vector.load %arg5[%c0_10, %c0_11] : memref<8x128xf32, #tpu.memory_space<vmem>>, vector<8x128xf32>
    %cst = arith.constant 1.000000e+00 : f32
    %9 = vector.broadcast %cst : f32 to vector<8x128xf32>
    %10 = arith.subf %9, %6 : vector<8x128xf32>
    %11 = arith.mulf %5, %10 : vector<8x128xf32>
    %cst_12 = arith.constant 1.000000e+00 : f32
    %12 = vector.broadcast %cst_12 : f32 to vector<8x128xf32>
    %13 = arith.subf %12, %8 : vector<8x128xf32>
    %14 = arith.mulf %7, %13 : vector<8x128xf32>
    %15 = arith.addf %3, %11 : vector<8x128xf32>
    %16 = arith.addf %4, %14 : vector<8x128xf32>
    %c0_13 = arith.constant 0 : index
    %c0_14 = arith.constant 0 : index
    %17 = vector.load %arg8[%c0_13, %c0_14] : memref<8x128xf32, #tpu.memory_space<vmem>>, vector<8x128xf32>
    tpu.vector_store %arg8[%c0_13, %c0_14], %15 {strides = array<i32>} : memref<8x128xf32, #tpu.memory_space<vmem>>, vector<8x128xf32>,
    %c0_15 = arith.constant 0 : index
    %c0_16 = arith.constant 0 : index
    %18 = vector.load %arg9[%c0_15, %c0_16] : memref<8x128xf32, #tpu.memory_space<vmem>>, vector<8x128xf32>
    tpu.vector_store %arg9[%c0_15, %c0_16], %16 {strides = array<i32>} : memref<8x128xf32, #tpu.memory_space<vmem>>, vector<8x128xf32>,
    %c0_i32_17 = arith.constant 0 : i32
    %19 = arith.cmpi eq, %arg1, %c0_i32_17 : i32
    %20 = arith.extui %19 : i1 to i32
    %c0_i32_18 = arith.constant 0 : i32
    %21 = arith.cmpi ne, %20, %c0_i32_18 : i32
    scf.if %21 {
      %c0_19 = arith.constant 0 : index
      %c0_20 = arith.constant 0 : index
      %22 = vector.load %arg8[%c0_19, %c0_20] : memref<8x128xf32, #tpu.memory_space<vmem>>, vector<8x128xf32>
      %cst_21 = arith.constant dense<0.000000e+00> : vector<8xf32>
      %23 = vector.multi_reduction <add>, %22, %cst_21 [1] : vector<8x128xf32> to vector<8xf32>
      %24 = vector.shape_cast %23 : vector<8xf32> to vector<8x1xf32>
      %c0_22 = arith.constant 0 : index
      %c0_23 = arith.constant 0 : index
      %25 = vector.load %arg9[%c0_22, %c0_23] : memref<8x128xf32, #tpu.memory_space<vmem>>, vector<8x128xf32>
      %cst_24 = arith.constant dense<0.000000e+00> : vector<8xf32>
      %26 = vector.multi_reduction <add>, %25, %cst_24 [1] : vector<8x128xf32> to vector<8xf32>
      %27 = vector.shape_cast %26 : vector<8xf32> to vector<8x1xf32>
      %c0_25 = arith.constant 0 : index
      %c0_26 = arith.constant 0 : index
      %28 = vector.load %arg6[%c0_25, %c0_26] : memref<8x1xf32, #tpu.memory_space<vmem>>, vector<8x1xf32>
      %29 = arith.addf %27, %24 : vector<8x1xf32>
      %cst_27 = arith.constant 9.99999997E-7 : f32
      %30 = vector.broadcast %cst_27 : f32 to vector<8x1xf32>
      %31 = arith.addf %29, %30 : vector<8x1xf32>
      %32 = arith.divf %27, %31 : vector<8x1xf32>
      %33 = math.log %32 : vector<8x1xf32>
      %cst_28 = arith.constant -1.000000e+02 : f32
      %34 = vector.broadcast %cst_28 : f32 to vector<8x1xf32>
      %35 = arith.maximumf %33, %34 : vector<8x1xf32>
      %cst_29 = arith.constant 1.000000e+00 : f32
      %36 = vector.broadcast %cst_29 : f32 to vector<8x1xf32>
      %37 = arith.subf %36, %32 : vector<8x1xf32>
      %38 = math.log %37 : vector<8x1xf32>
      %cst_30 = arith.constant -1.000000e+02 : f32
      %39 = vector.broadcast %cst_30 : f32 to vector<8x1xf32>
      %40 = arith.maximumf %38, %39 : vector<8x1xf32>
      %41 = arith.mulf %28, %35 : vector<8x1xf32>
      %cst_31 = arith.constant 1.000000e+00 : f32
      %42 = vector.broadcast %cst_31 : f32 to vector<8x1xf32>
      %43 = arith.subf %42, %28 : vector<8x1xf32>
      %44 = arith.mulf %43, %40 : vector<8x1xf32>
      %45 = arith.addf %41, %44 : vector<8x1xf32>
      %cst_32 = arith.constant 0.000000e+00 : f32
      %46 = vector.broadcast %cst_32 : f32 to vector<8x1xf32>
      %47 = arith.subf %46, %45 : vector<8x1xf32>
      %c0_33 = arith.constant 0 : index
      %c0_34 = arith.constant 0 : index
      %48 = vector.load %arg7[%c0_33, %c0_34] : memref<8x1xf32, #tpu.memory_space<vmem>>, vector<8x1xf32>
      tpu.vector_store %arg7[%c0_33, %c0_34], %47 {strides = array<i32>} : memref<8x1xf32, #tpu.memory_space<vmem>>, vector<8x1xf32>,
    } else {
    }
    return
  }
  func.func @transform_0(%arg0: i32, %arg1: i32) -> (i32, i32) {
    %c0_i32 = arith.constant 0 : i32
    return %arg0, %arg1 : i32, i32
  }
  func.func @transform_1(%arg0: i32, %arg1: i32) -> (i32, i32) {
    %c0_i32 = arith.constant 0 : i32
    return %arg0, %arg1 : i32, i32
  }
  func.func @transform_2(%arg0: i32, %arg1: i32) -> (i32, i32) {
    %c0_i32 = arith.constant 0 : i32
    return %arg0, %arg1 : i32, i32
  }
  func.func @transform_3(%arg0: i32, %arg1: i32) -> (i32, i32) {
    %c0_i32 = arith.constant 0 : i32
    return %arg0, %arg1 : i32, i32
  }
  func.func @transform_4(%arg0: i32, %arg1: i32) -> (i32, i32) {
    %c0_i32 = arith.constant 0 : i32
    %c0_i32_0 = arith.constant 0 : i32
    return %arg0, %c0_i32 : i32, i32
  }
  func.func @transform_5(%arg0: i32, %arg1: i32) -> (i32, i32) {
    %c0_i32 = arith.constant 0 : i32
    %c0_i32_0 = arith.constant 0 : i32
    return %arg0, %c0_i32 : i32, i32
  }
}

</mosaic_0001>

<llo_original>
// kernel: tpu_custom_call.1
$region0: #{tpu_custom_call.1}
  #allocation0 [shape = 'u32[]', space=smem, size = 0x4, offset = 0x4, fixed_abs, tag = 'smem constant byte address 0x4 - core index']
  #allocation1 [shape = 'u32[72,128]{1,0:T(1,128)}', space=vmem, size = 0x9000, scoped, tag = 'internal scratch']
  #allocation2 [shape = 'f32[8,128]{1,0:T(8,128)}', space=vmem, size = 0x1000, scoped, tag = 'scratch operand']
  #allocation3 [shape = 'f32[8,128]{1,0:T(8,128)}', space=vmem, size = 0x1000, scoped, tag = 'scratch operand']
  %s0 = inlined_call_operand.vmem [shape: f32[8,128], index: 0, kind: input, shape index: {}]
  %s1 = inlined_call_operand.hbm [shape: f32[8,128], index: 1, kind: input, shape index: {}]
  %s2 = inlined_call_operand.hbm [shape: f32[8,128], index: 2, kind: input, shape index: {}]
  %s3 = inlined_call_operand.hbm [shape: f32[8,128], index: 3, kind: input, shape index: {}]
  %s4 = inlined_call_operand.vmem [shape: f32[8,1], index: 4, kind: input, shape index: {}]
  %s5 = inlined_call_operand.vmem [shape: f32[8,1], index: 5, kind: output, shape index: {}]
  %s6 = sld [smem:[#allocation0]]
  $region50: #{tpu_custom_call.1} parent=0
    _
  %s8 = ssub.s32 1, %s6
  %s9 = scalar_select 0, %s8, %s6
  $region1: #{tpu_custom_call.1} parent=0
    #allocation4 [shape = 'u8[4096]{0}', space=vmem, size = 0x1000, scoped, tag = 'input window, operand 1, single buffered']
    #allocation5 [shape = 's32[1]{0}', space=sflag, size = 0x4, scoped, tag = 'scoped memory for tpu_custom_call.1']
    #allocation6 [shape = 'u8[4096]{0}', space=vmem, size = 0x1000, scoped, tag = 'input window, operand 2, single buffered']
    #allocation7 [shape = 's32[1]{0}', space=sflag, size = 0x4, scoped, tag = 'scoped memory for tpu_custom_call.1']
    #allocation8 [shape = 'u8[4096]{0}', space=vmem, size = 0x1000, scoped, tag = 'input window, operand 3, single buffered']
    %10 = vsyncpa [#allocation5], 0
    %11 = vsyncpa [#allocation7], 0
    // Predicated region
    $region2: #{tpu_custom_call.1} parent=1 // pred_check
      _
    $region3: #{tpu_custom_call.1} parent=1 // pred_check_branch
      %13 = sbr.rel (0) target = $region5
    $region4: #{tpu_custom_call.1} parent=1 // pred_region
      _
    $region5: #{tpu_custom_call.1} parent=1 // pred_fallthru
      _
    // Predicated region
    $region6: #{tpu_custom_call.1} parent=1 // pred_check
      _
    $region7: #{tpu_custom_call.1} parent=1 // pred_check_branch
      %15 = sbr.rel (0) target = $region9
    $region8: #{tpu_custom_call.1} parent=1 // pred_region
      %17 = vsyncadd [#allocation5], 0
      %s19 = sshll.u32 %s1, 4
      %s20 = int_to_ptr.hbm [resolvable:$true] %s19
      %s21 = sshll.u32 [#allocation4], 4
      %s22 = int_to_ptr.vmem [resolvable:$true] %s21
      %24 = dma.hbm_to_vmem [thread:$0]  %s20, 128, %s22, [#allocation5]
    $region9: #{tpu_custom_call.1} parent=1 // pred_fallthru
      _
    // Predicated region
    $region10: #{tpu_custom_call.1} parent=1 // pred_check
      _
    $region11: #{tpu_custom_call.1} parent=1 // pred_check_branch
      %26 = sbr.rel (0) target = $region13
    $region12: #{tpu_custom_call.1} parent=1 // pred_region
      %28 = vsyncadd [#allocation7], 0
      %s30 = sshll.u32 %s2, 4
      %s31 = int_to_ptr.hbm [resolvable:$true] %s30
      %s32 = sshll.u32 [#allocation6], 4
      %s33 = int_to_ptr.vmem [resolvable:$true] %s32
      %35 = dma.hbm_to_vmem [thread:$0]  %s31, 128, %s33, [#allocation7]
    $region13: #{tpu_custom_call.1} parent=1 // pred_fallthru
      _
    // Predicated region
    $region14: #{tpu_custom_call.1} parent=1 // pred_check
      _
    $region15: #{tpu_custom_call.1} parent=1 // pred_check_branch
      %37 = sbr.rel (0) target = $region17
    $region16: #{tpu_custom_call.1} parent=1 // pred_region
      %39 = vsyncadd [#allocation7], 0
      %s41 = sshll.u32 %s3, 4
      %s42 = int_to_ptr.hbm [resolvable:$true] %s41
      %s43 = sshll.u32 [#allocation8], 4
      %s44 = int_to_ptr.vmem [resolvable:$true] %s43
      %46 = dma.hbm_to_vmem [thread:$0]  %s42, 128, %s44, [#allocation7]
    $region17: #{tpu_custom_call.1} parent=1 // pred_fallthru
      _
    // Predicated region
    $region18: #{tpu_custom_call.1} parent=1 // pred_check
      _
    $region19: #{tpu_custom_call.1} parent=1 // pred_check_branch
      %48 = sbr.rel (0) target = $region21
    $region20: #{tpu_custom_call.1} parent=1 // pred_region
      _
    $region21: #{tpu_custom_call.1} parent=1 // pred_fallthru
      _
    // Predicated region
    $region22: #{tpu_custom_call.1} parent=1 // pred_check
      _
    $region23: #{tpu_custom_call.1} parent=1 // pred_check_branch
      %50 = sbr.rel (0) target = $region25
    $region24: #{tpu_custom_call.1} parent=1 // pred_region
      %52 = dma.done [#allocation5], 128
    $region25: #{tpu_custom_call.1} parent=1 // pred_fallthru
      _
    // Predicated region
    $region26: #{tpu_custom_call.1} parent=1 // pred_check
      _
    $region27: #{tpu_custom_call.1} parent=1 // pred_check_branch
      %54 = sbr.rel (0) target = $region29
    $region28: #{tpu_custom_call.1} parent=1 // pred_region
      %56 = dma.done [#allocation7], 128
    $region29: #{tpu_custom_call.1} parent=1 // pred_fallthru
      _
    // Predicated region
    $region30: #{tpu_custom_call.1} parent=1 // pred_check
      _
    $region31: #{tpu_custom_call.1} parent=1 // pred_check_branch
      %58 = sbr.rel (0) target = $region33
    $region32: #{tpu_custom_call.1} parent=1 // pred_region
      %60 = dma.done [#allocation7], 128
    $region33: #{tpu_custom_call.1} parent=1 // pred_fallthru
      _
    %p61 = scmp.eq.s32.totalorder 0, 0
    // Predicated region
    $region34: #{tpu_custom_call.1} parent=1 // pred_check
      %p62 = pneg %p61
    $region35: #{tpu_custom_call.1} parent=1 // pred_check_branch
      %64 = sbr.rel (%p62) target = $region37
    $region36: #{tpu_custom_call.1} parent=1 // pred_region
      %65 = vst [vmem:[#allocation2] sm:$0xff] 0.0
      %66 = vst [vmem:[#allocation3] sm:$0xff] 0.0
    $region37: #{tpu_custom_call.1} parent=1 // pred_fallthru
      _
    %v67 = vld [vmem:[#allocation2] sm:$0xff]
    %v68 = vld [vmem:[#allocation3] sm:$0xff]
    %v69 = vld [vmem:[%s0] sm:$0xff]
    %v70 = vld [vmem:[#allocation6] sm:$0xff]
    %v71 = vld [vmem:[#allocation4] sm:$0xff]
    %v72 = vld [vmem:[#allocation8] sm:$0xff]
    %v73 = vsub.f32 1.0, %v70
    %v74 = vmul.f32 %v69, %v73
    %v75 = vsub.f32 1.0, %v72
    %v76 = vmul.f32 %v71, %v75
    %v77 = vadd.f32 %v67, %v74
    %v78 = vadd.f32 %v68, %v76
    %79 = vst [vmem:[#allocation2] sm:$0xff] %v77
    %80 = vst [vmem:[#allocation3] sm:$0xff] %v78
    // Predicated region
    $region38: #{tpu_custom_call.1} parent=1 // pred_check
      %p81 = pneg %p61
    $region39: #{tpu_custom_call.1} parent=1 // pred_check_branch
      %83 = sbr.rel (%p81) target = $region41
    $region40: #{tpu_custom_call.1} parent=1 // pred_region
      %v84 = vld [vmem:[#allocation2] sm:$0xff]
      %85 = vadd.xlane.f32.xlu0 %v84
      %v86 = vpop.xlane.xlu0 %85
      %v87 = vld [vmem:[#allocation3] sm:$0xff]
      %88 = vadd.xlane.f32.xlu0 %v87
      %v89 = vpop.xlane.xlu0 %88
      %v90 = vld [vmem:[%s4] sm:$0xff]
      %v91 = vadd.f32 %v89, %v86
      %v92 = vadd.f32 %v91, 1e-06
      %v93 = vrcp.pop %v92
      %v94 = vmul.f32 %v92, %v93
      %v95 = vsub.f32 1.0, %v94
      %v96 = vmul.f32 %v93, %v95
      %v97 = vadd.f32 %v93, %v96
      %vm98 = vweird.f32 %v92
      %vm99 = vweird.f32 %v93
      %vm100 = vmor %vm98, %vm99
      %v101 = vsel %vm100, %v93, %v97
      %v102 = vand.u32 2147483647, %v92
      %vm103 = vcmp.eq.f32.partialorder %v102, 8.507059e+37
      %v104 = vand.u32 %v92, 2147483648
      %v105 = vor.u32 1.1754944e-38, %v104
      %v106 = vsel %vm103, %v105, %v101
      %v107 = vmul.f32 %v89, %v106
      %v108 = vlog2.pop %v107
      %v109 = vmul.f32 %v108, 0.6931472
      %v110 = vmax.f32 %v109, -100.0
      %v111 = vsub.f32 1.0, %v107
      %v112 = vlog2.pop %v111
      %v113 = vmul.f32 %v112, 0.6931472
      %v114 = vmax.f32 %v113, -100.0
      %v115 = vmul.f32 %v90, %v110
      %v116 = vsub.f32 1.0, %v90
      %v117 = vmul.f32 %v116, %v114
      %v118 = vadd.f32 %v115, %v117
      %v119 = vsub.f32 0.0, %v118
      %vm120 = vcmask 7168
      %121 = vst.msk [vmem:[%s5] sm:$0xff] %vm120, %v119
    $region41: #{tpu_custom_call.1} parent=1 // pred_fallthru
      _
    // Predicated region
    $region42: #{tpu_custom_call.1} parent=1 // pred_check
      _
    $region43: #{tpu_custom_call.1} parent=1 // pred_check_branch
      %123 = sbr.rel (0) target = $region45
    $region44: #{tpu_custom_call.1} parent=1 // pred_region
      _
    $region45: #{tpu_custom_call.1} parent=1 // pred_fallthru
      _
    // Predicated region
    $region46: #{tpu_custom_call.1} parent=1 // pred_check
      _
    $region47: #{tpu_custom_call.1} parent=1 // pred_check_branch
      %125 = sbr.rel (0) target = $region49
    $region48: #{tpu_custom_call.1} parent=1 // pred_region
      _
    $region49: #{tpu_custom_call.1} parent=1 // pred_fallthru
      _
    %126 = vsyncpa [#allocation5], 1
    %127 = vsyncpa [#allocation7], 1

</llo_original>
